<compile_context>
chip_gen: v5e
topology: v5e:2x2
jax: 0.10.0
libtpu: 0.0.40
codegen_flags: <defaults>
</compile_context>

<pallas_src>
import jax
import jax.numpy as jnp
from jax.experimental import pallas as pl
from jax.experimental.pallas import tpu as pltpu


def _round_up(a, b):
    return ((a + b - 1) // b) * b


def meshconv_kernel(f_ref, w12_ref, w34_ref, w0_ref, b_ref, o_ref):
    """Fused symmetric functions + (1,5) conv for one (batch, E-tile) block.

    f_ref  : (1, 5*C_in, tE)  gathered 1-ring features, rows = [f1 | f2 | f3 | f4 | f0],
                              E on the 128-lane axis
    w12_ref: (C_out, 2*C_in)  [W1 | W2]  (acts on the stacked sum  [f1+f3 ; f2+f4])
    w34_ref: (C_out, 2*C_in)  [W3 | W4]  (acts on the stacked diff [|f1-f3| ; |f2-f4|])
    w0_ref : (C_out, C_in)    W0 (self-edge tap)
    b_ref  : (C_out, 1)       bias
    o_ref  : (1, C_out, tE)   output tile, lane-dense (E on lanes)
    """
    C_in = w0_ref.shape[1]
    C_out, tE = o_ref.shape[1], o_ref.shape[2]

    f = f_ref[0]                                  # (5*C_in, tE)
    fa = f[: 2 * C_in]                            # [f1 ; f2]
    fb = f[2 * C_in: 4 * C_in]                    # [f3 ; f4]
    f0 = f[4 * C_in:]                             # f0

    # Symmetric (order-invariant) functions of the 1-ring (VPU work).
    s = fa + fb                                   # [f1+f3 ; f2+f4]
    d = jnp.abs(fa - fb)                          # [|f1-f3| ; |f2-f4|]

    # Conv2d(C_in, C_out, (1,5)) == W0@f0 + [W1|W2]@s + [W3|W4]@d + b  (3 MXU matmuls).
    # Bias folded into the f32 accumulator init; output stays (C_out, tE) so the store
    # is lane-dense.
    acc = jnp.broadcast_to(b_ref[...], (C_out, tE)).astype(jnp.float32)
    acc = acc + jnp.dot(w0_ref[...], f0, preferred_element_type=jnp.float32)
    acc = acc + jnp.dot(w12_ref[...], s, preferred_element_type=jnp.float32)
    acc = acc + jnp.dot(w34_ref[...], d, preferred_element_type=jnp.float32)
    o_ref[0] = acc.astype(o_ref.dtype)


def _pick_tile_e(E, C_in, C_out, max_tile=1024, vmem_budget_bytes=12 * 1024 * 1024):
    """Largest lane tile (multiple of 128, capped) whose double-buffered in/out blocks
    fit comfortably within the scoped-VMEM defaults of v5e/v6e/v7x."""
    t = min(max_tile, _round_up(E, 128))
    t = max(128, _round_up(t, 128))
    # bytes per step (f block + out block), f32, x2 for double buffering
    while t > 128 and 2 * 4 * (5 * C_in + C_out) * t > vmem_budget_bytes:
        t -= 128
    return t


def mesh_conv(x, gemm_edges, weight, bias, *, tile_e=None):
    """
    x:          (B, C_in, E, 1) float32  edge features (PyTorch NCHW layout)
    gemm_edges: (B, E, 4) int32          1-ring neighbor indices (-1 marks boundary)
    weight:     (C_out, C_in, 1, 5), bias: (C_out,)
    returns     (B, C_out, E, 1)
    """
    B, C_in, E, _ = x.shape
    C_out = weight.shape[0]
    assert weight.shape[3] == 5

    # ---------------- glue (plain JAX): pad_gemm + create_GeMM's gather ----------------
    # Tap order chosen as [n1, n2, n3, n4, self] so the kernel's row slices at
    # 0 / 2*C_in / 4*C_in pick out the symmetric pairs contiguously.
    edge_ids = jnp.broadcast_to(
        jnp.arange(E, dtype=jnp.int32)[None, :, None], (B, E, 1))
    Gi = jnp.concatenate([gemm_edges.astype(jnp.int32), edge_ids], axis=2) + 1  # (B,E,5); -1 -> 0

    x_cf = x[..., 0]                                                            # (B, C_in, E)
    x_pad = jnp.concatenate([jnp.zeros((B, C_in, 1), x.dtype), x_cf], axis=2)   # (B, C_in, E+1)
    # f[b, c, e, kk] = x_pad[b, c, Gi[b, e, kk]]
    f = jax.vmap(lambda xp, g: xp[:, g])(x_pad, Gi)                             # (B, C_in, E, 5)
    f = jnp.transpose(f, (0, 3, 1, 2)).reshape(B, 5 * C_in, E)                  # rows [f1|f2|f3|f4|f0], E lane-dense

    # conv weights, re-packed for the 3-matmul form
    w = weight[:, :, 0, :]                                                      # (C_out, C_in, 5)
    w0 = w[:, :, 0]                                                             # (C_out, C_in)
    w12 = jnp.concatenate([w[:, :, 1], w[:, :, 2]], axis=1)                     # (C_out, 2*C_in)
    w34 = jnp.concatenate([w[:, :, 3], w[:, :, 4]], axis=1)                     # (C_out, 2*C_in)
    b_col = bias.reshape(C_out, 1)

    # ---------------- tiling: grid over (batch, E tiles); E padded to the tile ---------
    tE = tile_e if tile_e is not None else _pick_tile_e(E, C_in, C_out)
    tE = max(128, _round_up(tE, 128))
    E_pad = _round_up(E, tE)
    if E_pad != E:
        f = jnp.pad(f, ((0, 0), (0, 0), (0, E_pad - E)))

    grid = (B, E_pad // tE)

    out = pl.pallas_call(
        meshconv_kernel,
        out_shape=jax.ShapeDtypeStruct((B, C_out, E_pad), x.dtype),
        grid=grid,
        in_specs=[
            pl.BlockSpec((1, 5 * C_in, tE), lambda b, j: (b, 0, j)),
            pl.BlockSpec((C_out, 2 * C_in), lambda b, j: (0, 0)),
            pl.BlockSpec((C_out, 2 * C_in), lambda b, j: (0, 0)),
            pl.BlockSpec((C_out, C_in), lambda b, j: (0, 0)),
            pl.BlockSpec((C_out, 1), lambda b, j: (0, 0)),
        ],
        out_specs=pl.BlockSpec((1, C_out, tE), lambda b, j: (b, 0, j)),
        compiler_params=pltpu.CompilerParams(
            dimension_semantics=("parallel", "parallel"),
            vmem_limit_bytes=32 * 1024 * 1024,
        ),
    )(f, w12, w34, w0, b_col)

    # Output is already channels-first; drop padding and restore the trailing axis.
    return out[:, :, :E][..., None]                                             # (B, C_out, E, 1)


def mesh_conv_ref(x, gemm_edges, weight, bias):
    """Pure-JAX reference following the PyTorch MeshConv code path exactly."""
    B, C_in, E, _ = x.shape
    edge_ids = jnp.broadcast_to(
        jnp.arange(E, dtype=jnp.int32)[None, :, None], (B, E, 1))
    Gi = jnp.concatenate([edge_ids, gemm_edges.astype(jnp.int32)], axis=2) + 1
    x_pad = jnp.concatenate(
        [jnp.zeros((B, C_in, 1), x.dtype), x[..., 0]], axis=2)                  # (B, C, E+1)
    f = jax.vmap(lambda xp, g: xp[:, g])(x_pad, Gi)                             # (B, C, E, 5)
    f0, f1, f2, f3, f4 = [f[..., i] for i in range(5)]
    G = jnp.stack(
        [f0, f1 + f3, f2 + f4, jnp.abs(f1 - f3), jnp.abs(f2 - f4)], axis=3)
    out = jnp.einsum('bcek,ock->boe', G, weight[:, :, 0, :]) + bias[None, :, None]
    return out[..., None]


def _run_case(key, B, C_in, C_out, E, tile_e=None):
    k1, k2, k3, k4 = jax.random.split(key, 4)
    kk = 5
    x = jax.random.normal(k1, (B, C_in, E, 1), jnp.float32)
    # synthetic mesh: gemm_edges with some -1 boundary entries, edges_count == E
    gemm_edges = jax.random.randint(k2, (B, E, 4), -1, E, dtype=jnp.int32)
    # deterministic Conv2d(C_in, C_out, kernel_size=(1, 5), bias=True) params
    fan_in = C_in * 1 * kk
    bound = 1.0 / (fan_in ** 0.5)
    weight = jax.random.uniform(k3, (C_out, C_in, 1, kk), jnp.float32, -bound, bound)
    bias = jax.random.uniform(k4, (C_out,), jnp.float32, -bound, bound)

    out = jax.block_until_ready(mesh_conv(x, gemm_edges, weight, bias, tile_e=tile_e))
    ref = mesh_conv_ref(x, gemm_edges, weight, bias)
    assert out.shape == (B, C_out, E, 1), out.shape
    assert jnp.allclose(out, ref, atol=1e-5, rtol=1e-5), "mismatch vs reference"


if __name__ == "__main__":
    key = jax.random.PRNGKey(0)
    ka, kb = jax.random.split(key)
    # tiny case (matches the module's typical toy shapes): single lane tile
    _run_case(ka, B=2, C_in=4, C_out=8, E=16)
    # non-multiple E with an explicit 128 tile: exercises padding + the (B, E/tE) grid
    _run_case(kb, B=2, C_in=8, C_out=16, E=300, tile_e=128)
    print("KERNEL_OK")
</pallas_src>

<mosaic_0001>
module attributes {stable_mosaic.version = 11 : i64} {
  func.func @meshconv_kernel(%arg0: i32, %arg1: i32, %arg2: memref<1x20x128xf32, #tpu.memory_space<vmem>>, %arg3: memref<8x8xf32, #tpu.memory_space<vmem>>, %arg4: memref<8x8xf32, #tpu.memory_space<vmem>>, %arg5: memref<8x4xf32, #tpu.memory_space<vmem>>, %arg6: memref<8x1xf32, #tpu.memory_space<vmem>>, %arg7: memref<1x8x128xf32, #tpu.memory_space<vmem>>) attributes {dimension_semantics = [#tpu.dimension_semantics<parallel>, #tpu.dimension_semantics<parallel>], iteration_bounds = array<i64: 2, 1>, scalar_prefetch = 0 : i64, scratch_operands = 0 : i64, tpu.core_type = #tpu.core_type<tc>, window_params = [{transform_indices = @transform_0, window_bounds = array<i64: 1, 20, 128>}, {pipeline_mode = #tpu.pipeline_mode<synchronous>, transform_indices = @transform_1, window_bounds = array<i64: 8, 8>}, {pipeline_mode = #tpu.pipeline_mode<synchronous>, transform_indices = @transform_2, window_bounds = array<i64: 8, 8>}, {pipeline_mode = #tpu.pipeline_mode<synchronous>, transform_indices = @transform_3, window_bounds = array<i64: 8, 4>}, {pipeline_mode = #tpu.pipeline_mode<synchronous>, transform_indices = @transform_4, window_bounds = array<i64: 8, 1>}, {transform_indices = @transform_5, window_bounds = array<i64: 1, 8, 128>}]} {
    %c0 = arith.constant 0 : index
    %c0_0 = arith.constant 0 : index
    %c0_1 = arith.constant 0 : index
    %0 = vector.load %arg2[%c0, %c0_0, %c0_1] : memref<1x20x128xf32, #tpu.memory_space<vmem>>, vector<1x20x128xf32>
    %1 = vector.shape_cast %0 : vector<1x20x128xf32> to vector<20x128xf32>
    %2 = vector.extract_strided_slice %1 {offsets = [0, 0], sizes = [8, 128], strides = [1, 1]} : vector<20x128xf32> to vector<8x128xf32>
    %3 = vector.extract_strided_slice %1 {offsets = [8, 0], sizes = [8, 128], strides = [1, 1]} : vector<20x128xf32> to vector<8x128xf32>
    %4 = vector.extract_strided_slice %1 {offsets = [16, 0], sizes = [4, 128], strides = [1, 1]} : vector<20x128xf32> to vector<4x128xf32>
    %5 = arith.addf %2, %3 : vector<8x128xf32>
    %6 = arith.subf %2, %3 : vector<8x128xf32>
    %7 = math.absf %6 : vector<8x128xf32>
    %c0_2 = arith.constant 0 : index
    %c0_3 = arith.constant 0 : index
    %8 = vector.load %arg6[%c0_2, %c0_3] : memref<8x1xf32, #tpu.memory_space<vmem>>, vector<8x1xf32>
    %9 = vector.shape_cast %8 : vector<8x1xf32> to vector<8x1xf32>
    %10 = vector.broadcast %9 : vector<8x1xf32> to vector<8x128xf32>
    %c0_4 = arith.constant 0 : index
    %c0_5 = arith.constant 0 : index
    %11 = vector.load %arg5[%c0_4, %c0_5] : memref<8x4xf32, #tpu.memory_space<vmem>>, vector<8x4xf32>
    %cst = arith.constant dense<0.000000e+00> : vector<8x128xf32>
    %12 = tpu.matmul %11, %4, %cst {dimension_numbers = #tpu.dot_dimension_numbers<[1], [0], [0], [1], [0, 0, 1, 1], [], []>} : vector<8x4xf32>, vector<4x128xf32>, vector<8x128xf32> -> vector<8x128xf32>
    %13 = arith.addf %10, %12 : vector<8x128xf32>
    %c0_6 = arith.constant 0 : index
    %c0_7 = arith.constant 0 : index
    %14 = vector.load %arg3[%c0_6, %c0_7] : memref<8x8xf32, #tpu.memory_space<vmem>>, vector<8x8xf32>
    %cst_8 = arith.constant dense<0.000000e+00> : vector<8x128xf32>
    %15 = tpu.matmul %14, %5, %cst_8 {dimension_numbers = #tpu.dot_dimension_numbers<[1], [0], [0], [1], [0, 0, 1, 1], [], []>} : vector<8x8xf32>, vector<8x128xf32>, vector<8x128xf32> -> vector<8x128xf32>
    %16 = arith.addf %13, %15 : vector<8x128xf32>
    %c0_9 = arith.constant 0 : index
    %c0_10 = arith.constant 0 : index
    %17 = vector.load %arg4[%c0_9, %c0_10] : memref<8x8xf32, #tpu.memory_space<vmem>>, vector<8x8xf32>
    %cst_11 = arith.constant dense<0.000000e+00> : vector<8x128xf32>
    %18 = tpu.matmul %17, %7, %cst_11 {dimension_numbers = #tpu.dot_dimension_numbers<[1], [0], [0], [1], [0, 0, 1, 1], [], []>} : vector<8x8xf32>, vector<8x128xf32>, vector<8x128xf32> -> vector<8x128xf32>
    %19 = arith.addf %16, %18 : vector<8x128xf32>
    %c0_12 = arith.constant 0 : index
    %c0_13 = arith.constant 0 : index
    %c0_14 = arith.constant 0 : index
    %20 = vector.load %arg7[%c0_12, %c0_13, %c0_14] : memref<1x8x128xf32, #tpu.memory_space<vmem>>, vector<1x8x128xf32>
    %21 = vector.shape_cast %20 : vector<1x8x128xf32> to vector<8x128xf32>
    %22 = vector.shape_cast %19 : vector<8x128xf32> to vector<1x8x128xf32>
    tpu.vector_store %arg7[%c0_12, %c0_13, %c0_14], %22 {strides = array<i32>} : memref<1x8x128xf32, #tpu.memory_space<vmem>>, vector<1x8x128xf32>,
    return
  }
  func.func @transform_0(%arg0: i32, %arg1: i32) -> (i32, i32, i32) {
    %c0_i32 = arith.constant 0 : i32
    %c0_i32_0 = arith.constant 0 : i32
    return %arg0, %c0_i32, %arg1 : i32, i32, i32
  }
  func.func @transform_1(%arg0: i32, %arg1: i32) -> (i32, i32) {
    %c0_i32 = arith.constant 0 : i32
    %c0_i32_0 = arith.constant 0 : i32
    %c0_i32_1 = arith.constant 0 : i32
    return %c0_i32, %c0_i32_0 : i32, i32
  }
  func.func @transform_2(%arg0: i32, %arg1: i32) -> (i32, i32) {
    %c0_i32 = arith.constant 0 : i32
    %c0_i32_0 = arith.constant 0 : i32
    %c0_i32_1 = arith.constant 0 : i32
    return %c0_i32, %c0_i32_0 : i32, i32
  }
  func.func @transform_3(%arg0: i32, %arg1: i32) -> (i32, i32) {
    %c0_i32 = arith.constant 0 : i32
    %c0_i32_0 = arith.constant 0 : i32
    %c0_i32_1 = arith.constant 0 : i32
    return %c0_i32, %c0_i32_0 : i32, i32
  }
  func.func @transform_4(%arg0: i32, %arg1: i32) -> (i32, i32) {
    %c0_i32 = arith.constant 0 : i32
    %c0_i32_0 = arith.constant 0 : i32
    %c0_i32_1 = arith.constant 0 : i32
    return %c0_i32, %c0_i32_0 : i32, i32
  }
  func.func @transform_5(%arg0: i32, %arg1: i32) -> (i32, i32, i32) {
    %c0_i32 = arith.constant 0 : i32
    %c0_i32_0 = arith.constant 0 : i32
    return %arg0, %c0_i32, %arg1 : i32, i32, i32
  }
}

</mosaic_0001>

<llo_original>
// kernel: tpu_custom_call.1
$region0: #{tpu_custom_call.1}
  #allocation0 [shape = 'u32[]', space=smem, size = 0x4, offset = 0x4, fixed_abs, tag = 'smem constant byte address 0x4 - core index']
  #allocation1 [shape = 'u32[72,128]{1,0:T(1,128)}', space=vmem, size = 0x9000, scoped, tag = 'internal scratch']
  %s0 = inlined_call_operand.vmem [shape: f32[2,20,128], index: 0, kind: input, shape index: {}]
  %s1 = inlined_call_operand.vmem [shape: f32[8,8], index: 1, kind: input, shape index: {}]
  %s2 = inlined_call_operand.vmem [shape: f32[8,8], index: 2, kind: input, shape index: {}]
  %s3 = inlined_call_operand.vmem [shape: f32[8,4], index: 3, kind: input, shape index: {}]
  %s4 = inlined_call_operand.vmem [shape: f32[8,1], index: 4, kind: input, shape index: {}]
  %s5 = inlined_call_operand.hbm [shape: f32[2,8,128], index: 5, kind: output, shape index: {}]
  %s6 = sld [smem:[#allocation0]]
  $region53: #{tpu_custom_call.1} parent=0
    _
  %s8 = ssub.s32 1, %s6
  %s9 = scalar_select 0, %s8, %s6
  $region1: #{tpu_custom_call.1} parent=0
    #allocation2 [shape = 'u8[8192]{0}', space=vmem, size = 0x2000, scoped, tag = 'output window, operand 0']
    #allocation3 [shape = 's32[2]{0}', space=sflag, size = 0x8, scoped, tag = 'scoped memory for tpu_custom_call.1']
    %10 = vsyncpa [#allocation3], 0
    %s11 = scalar_lea.sflag [#allocation3], 1
    %12 = vsyncpa %s11, 0
    loop: start=0, step=1, limit=4
    $region2: #{tpu_custom_call.1} parent=1 // loop_pre_header
      _
    $region3: #{tpu_custom_call.1} parent=1 // loop_header
      %s14 = sphi 0, %s18
      %p15 = scmp.ge.s32.totalorder %s14, 4
      %s21 = sphi 0, %s33
      %s22 = sphi 0, %s29
      %s23 = sphi 0, %s21
      %s24 = sphi 0, %s22
      %s25 = sphi 0, %s23
      %s26 = sphi 0, %s24
      %s38 = sphi 0, %s40
      %s41 = sphi 0, %s38
      %s42 = sphi 0, %s41
      %s58 = sphi 0, %s42
      %s62 = sphi 0, %s62
      %s64 = sphi 0, %s62
      %s65 = sphi 0, %s64
      %s79 = sphi 0, %s65
      %s83 = sphi 0, %s83
      %s85 = sphi 0, %s83
      %s86 = sphi 0, %s85
      %s100 = sphi 0, %s86
      %s104 = sphi 0, %s104
      %s106 = sphi 0, %s104
      %s107 = sphi 0, %s106
      %s121 = sphi 0, %s107
      %s125 = sphi 0, %s125
      %s127 = sphi 0, %s125
      %s128 = sphi 0, %s127
      %s142 = sphi 0, %s128
      %s150 = sphi 0, %s152
      %s153 = sphi 0, %s150
      %s154 = sphi 0, %s153
      %s170 = sphi 0, %s154
    $region4: #{tpu_custom_call.1} parent=1 // loop_header_branch
      %17 = sbr.rel (%p15) target = $region8
    $region5: #{tpu_custom_call.1} parent=1 // loop_body
      %s19 = ssub.s32 %s14, 1
      %s20 = ssub.s32 %s14, 2
      %s27 = sadd.s32 1, %s22
      %p28 = scmp.ge.s32.totalorder %s27, 1
      %s29 = scalar_select %p28, 0, %s27
      %s30 = sadd.s32 1, %s21
      %s31 = scalar_select %p28, %s30, %s21
      %p32 = scmp.ge.s32.totalorder %s31, 2
      %s33 = scalar_select %p32, 0, %s31
      %s34 = ssub.s32 %s21, %s33
      %s35 = ssub.s32 %s22, %s29
      %s36 = sor.u32 %s34, %s35
      %p37 = scmp.eq.s32.totalorder %s36, 0
      %s39 = sadd.s32 %s38, 1
      %s40 = scalar_select %p37, %s38, %s39
      %p43 = pneg %p37
      %p44 = scmp.eq.s32.totalorder %s14, 1
      %p45 = por %p43, %p44
      %p46 = scmp.ne.s32.totalorder %s38, %s41
      %p47 = scmp.eq.s32.totalorder %s14, 0
      %p48 = por %p46, %p47
      %p49 = scmp.ne.s32.totalorder %s38, %s41
      %p50 = scmp.eq.s32.totalorder %s19, 1
      %p51 = por %p49, %p50
      %p52 = scmp.ne.s32.totalorder %s41, %s42
      %p53 = scmp.eq.s32.totalorder %s19, 0
      %p54 = por %p52, %p53
      %p55 = scmp.ne.s32.totalorder %s41, %s42
      %p56 = scmp.eq.s32.totalorder %s20, 1
      %p57 = por %p55, %p56
      %p59 = scmp.ne.s32.totalorder %s42, %s58
      %p60 = scmp.eq.s32.totalorder %s20, 0
      %p61 = por %p59, %p60
      %s63 = sadd.s32 %s62, 1
      %p66 = scmp.eq.s32.totalorder %s14, 1
      %p67 = scmp.ne.s32.totalorder %s62, %s64
      %p68 = scmp.eq.s32.totalorder %s14, 0
      %p69 = por %p67, %p68
      %p70 = scmp.ne.s32.totalorder %s62, %s64
      %p71 = scmp.eq.s32.totalorder %s19, 1
      %p72 = por %p70, %p71
      %p73 = scmp.ne.s32.totalorder %s64, %s65
      %p74 = scmp.eq.s32.totalorder %s19, 0
      %p75 = por %p73, %p74
      %p76 = scmp.ne.s32.totalorder %s64, %s65
      %p77 = scmp.eq.s32.totalorder %s20, 1
      %p78 = por %p76, %p77
      %p80 = scmp.ne.s32.totalorder %s65, %s79
      %p81 = scmp.eq.s32.totalorder %s20, 0
      %p82 = por %p80, %p81
      %s84 = sadd.s32 %s83, 1
      %p87 = scmp.eq.s32.totalorder %s14, 1
      %p88 = scmp.ne.s32.totalorder %s83, %s85
      %p89 = scmp.eq.s32.totalorder %s14, 0
      %p90 = por %p88, %p89
      %p91 = scmp.ne.s32.totalorder %s83, %s85
      %p92 = scmp.eq.s32.totalorder %s19, 1
      %p93 = por %p91, %p92
      %p94 = scmp.ne.s32.totalorder %s85, %s86
      %p95 = scmp.eq.s32.totalorder %s19, 0
      %p96 = por %p94, %p95
      %p97 = scmp.ne.s32.totalorder %s85, %s86
      %p98 = scmp.eq.s32.totalorder %s20, 1
      %p99 = por %p97, %p98
      %p101 = scmp.ne.s32.totalorder %s86, %s100
      %p102 = scmp.eq.s32.totalorder %s20, 0
      %p103 = por %p101, %p102
      %s105 = sadd.s32 %s104, 1
      %p108 = scmp.eq.s32.totalorder %s14, 1
      %p109 = scmp.ne.s32.totalorder %s104, %s106
      %p110 = scmp.eq.s32.totalorder %s14, 0
      %p111 = por %p109, %p110
      %p112 = scmp.ne.s32.totalorder %s104, %s106
      %p113 = scmp.eq.s32.totalorder %s19, 1
      %p114 = por %p112, %p113
      %p115 = scmp.ne.s32.totalorder %s106, %s107
      %p116 = scmp.eq.s32.totalorder %s19, 0
      %p117 = por %p115, %p116
      %p118 = scmp.ne.s32.totalorder %s106, %s107
      %p119 = scmp.eq.s32.totalorder %s20, 1
      %p120 = por %p118, %p119
      %p122 = scmp.ne.s32.totalorder %s107, %s121
      %p123 = scmp.eq.s32.totalorder %s20, 0
      %p124 = por %p122, %p123
      %s126 = sadd.s32 %s125, 1
      %p129 = scmp.eq.s32.totalorder %s14, 1
      %p130 = scmp.ne.s32.totalorder %s125, %s127
      %p131 = scmp.eq.s32.totalorder %s14, 0
      %p132 = por %p130, %p131
      %p133 = scmp.ne.s32.totalorder %s125, %s127
      %p134 = scmp.eq.s32.totalorder %s19, 1
      %p135 = por %p133, %p134
      %p136 = scmp.ne.s32.totalorder %s127, %s128
      %p137 = scmp.eq.s32.totalorder %s19, 0
      %p138 = por %p136, %p137
      %p139 = scmp.ne.s32.totalorder %s127, %s128
      %p140 = scmp.eq.s32.totalorder %s20, 1
      %p141 = por %p139, %p140
      %p143 = scmp.ne.s32.totalorder %s128, %s142
      %p144 = scmp.eq.s32.totalorder %s20, 0
      %p145 = por %p143, %p144
      %s146 = ssub.s32 %s21, %s33
      %s147 = ssub.s32 %s22, %s29
      %s148 = sor.u32 %s146, %s147
      %p149 = scmp.eq.s32.totalorder %s148, 0
      %s151 = sadd.s32 %s150, 1
      %s152 = scalar_select %p149, %s150, %s151
      %p155 = pneg %p149
      %p156 = scmp.eq.s32.totalorder %s14, 1
      %p157 = por %p155, %p156
      %p158 = scmp.ne.s32.totalorder %s150, %s153
      %p159 = scmp.eq.s32.totalorder %s14, 0
      %p160 = por %p158, %p159
      %p161 = scmp.ne.s32.totalorder %s150, %s153
      %p162 = scmp.eq.s32.totalorder %s19, 1
      %p163 = por %p161, %p162
      %p164 = scmp.ne.s32.totalorder %s153, %s154
      %p165 = scmp.eq.s32.totalorder %s19, 0
      %p166 = por %p164, %p165
      %p167 = scmp.ne.s32.totalorder %s153, %s154
      %p168 = scmp.eq.s32.totalorder %s20, 1
      %p169 = por %p167, %p168
      %p171 = scmp.ne.s32.totalorder %s154, %s170
      %p172 = scmp.eq.s32.totalorder %s20, 0
      %p173 = por %p171, %p172
      %p174 = scmp.le.s32.totalorder 1, %s14
      %p175 = scmp.lt.s32.totalorder %s14, 3
      %p176 = pnand %p174, %p175
      %p177 = pneg %p176
      // Predicated region
      $region9: #{tpu_custom_call.1} parent=5 // pred_check
        _
      $region10: #{tpu_custom_call.1} parent=5 // pred_check_branch
        %179 = sbr.rel (%p176) target = $region12
      $region11: #{tpu_custom_call.1} parent=5 // pred_region
        %s180 = ssub.s32 %s14, 1
        // Predicated region
        $region13: #{tpu_custom_call.1} parent=11 // pred_check
          %p181 = pneg %p75
        $region14: #{tpu_custom_call.1} parent=11 // pred_check_branch
          %183 = sbr.rel (%p181) target = $region16
        $region15: #{tpu_custom_call.1} parent=11 // pred_region
          _
        $region16: #{tpu_custom_call.1} parent=11 // pred_fallthru
          _
        // Predicated region
        $region17: #{tpu_custom_call.1} parent=11 // pred_check
          %p184 = pneg %p96
        $region18: #{tpu_custom_call.1} parent=11 // pred_check_branch
          %186 = sbr.rel (%p184) target = $region20
        $region19: #{tpu_custom_call.1} parent=11 // pred_region
          _
        $region20: #{tpu_custom_call.1} parent=11 // pred_fallthru
          _
        // Predicated region
        $region21: #{tpu_custom_call.1} parent=11 // pred_check
          %p187 = pneg %p117
        $region22: #{tpu_custom_call.1} parent=11 // pred_check_branch
          %189 = sbr.rel (%p187) target = $region24
        $region23: #{tpu_custom_call.1} parent=11 // pred_region
          _
        $region24: #{tpu_custom_call.1} parent=11 // pred_fallthru
          _
        // Predicated region
        $region25: #{tpu_custom_call.1} parent=11 // pred_check
          %p190 = pneg %p138
        $region26: #{tpu_custom_call.1} parent=11 // pred_check_branch
          %192 = sbr.rel (%p190) target = $region28
        $region27: #{tpu_custom_call.1} parent=11 // pred_region
          _
        $region28: #{tpu_custom_call.1} parent=11 // pred_fallthru
          _
      $region12: #{tpu_custom_call.1} parent=5 // pred_fallthru
        _
      %p193 = scmp.lt.s32.totalorder %s14, 2
      // Predicated region
      $region29: #{tpu_custom_call.1} parent=5 // pred_check
        %p194 = pneg %p193
      $region30: #{tpu_custom_call.1} parent=5 // pred_check_branch
        %196 = sbr.rel (%p194) target = $region32
      $region31: #{tpu_custom_call.1} parent=5 // pred_region
        // Predicated region
        $region33: #{tpu_custom_call.1} parent=31 // pred_check
          %p197 = pneg %p48
        $region34: #{tpu_custom_call.1} parent=31 // pred_check_branch
          %199 = sbr.rel (%p197) target = $region36
        $region35: #{tpu_custom_call.1} parent=31 // pred_region
          %p200 = scmp.lt.s32.totalorder %s21, 1
          %s201 = scalar_select %p200, %s21, 1
          %p202 = scmp.lt.s32.totalorder %s22, 0
          %s203 = scalar_select %p202, %s22, 0
          %s204 = smul.addr %s201, 3
          %s205 = sadd.s32 %s203, %s204
          %s206 = smul.addr %s205, 8
          %s207 = scalar_lea.vmem %s0, %s206
        $region36: #{tpu_custom_call.1} parent=31 // pred_fallthru
          _
      $region32: #{tpu_custom_call.1} parent=5 // pred_fallthru
        _
      %p208 = scmp.le.s32.totalorder 1, %s14
      %p209 = scmp.lt.s32.totalorder %s14, 3
      %p210 = pnand %p208, %p209
      %p211 = pneg %p210
      // Predicated region
      $region37: #{tpu_custom_call.1} parent=5 // pred_check
        _
      $region38: #{tpu_custom_call.1} parent=5 // pred_check_branch
        %213 = sbr.rel (%p210) target = $region40
      $region39: #{tpu_custom_call.1} parent=5 // pred_region
        %s214 = ssub.s32 %s14, 1
        %p215 = scmp.lt.s32.totalorder %s23, 1
        %s216 = scalar_select %p215, %s23, 1
        %p217 = scmp.lt.s32.totalorder %s24, 0
        %s218 = scalar_select %p217, %s24, 0
        %s219 = smul.addr %s216, 3
        %s220 = sadd.s32 %s218, %s219
        %s221 = smul.addr %s220, 8
        %s222 = scalar_lea.vmem %s0, %s221
        %p223 = pneg %p54
        %p224 = pneg %p51
        %p225 = pneg %p75
        %p226 = pneg %p72
        %p227 = pneg %p96
        %p228 = pneg %p93
        %p229 = pneg %p117
        %p230 = pneg %p114
        %p231 = pneg %p138
        %p232 = pneg %p135
        %p233 = pneg %p166
        %p234 = pneg %p163
        %s235 = sand.u32 %s153, 1
        %s236 = scalar_lea.sflag [#allocation3], %s235
        %s237 = sand.u32 %s153, 1
        %s238 = smul.addr %s237, 8
        %s239 = scalar_lea.vmem [#allocation2], %s238
        %p240 = scmp.lt.s32.totalorder %s23, 1
        %s241 = scalar_select %p240, %s23, 1
        %p242 = scmp.lt.s32.totalorder %s24, 0
        %s243 = scalar_select %p242, %s24, 0
        %s244 = smul.addr %s241, 3
        %s245 = sadd.s32 %s243, %s244
        %s246 = smul.addr %s245, 8
        %s247 = scalar_lea.vmem %s0, %s246
        %v248 = vld [vmem:[%s247] sm:$0xff]
        %v249 = vld [vmem:[%s247 + $0x8] sm:$0xff]
        %v250 = vld [vmem:[%s247 + $0x10] sm:$0xf]
        %v251 = vadd.f32 %v248, %v249
        %v252 = vsub.f32 %v248, %v249
        %v253 = vand.u32 2147483647, %v252
        %v254 = vld [vmem:[%s4] sm:$0xff]
        %256 = vset.pattern.permute.xlu0 0
        %257 = vperm.xlu0 %256, %v254
        %v258 = vpop.permute.xlu0 %257
        %v260 = vld [vmem:[%s3] sm:$0xff]
        %vm261 = vcmask 31744
        %v263 = vsel %vm261, %v260, 0
        %vm265 = vcmask 1043456
        %v267 = vsel %vm265, %v250, 0
        %269 = vmatpush.msra.mxu0 0.0
        %270 = vmatpush.msra.mxu0 0.0
        %271 = vmatpush.msra.mxu0 0.0
        %272 = vmatpush.msra.mxu0 0.0
        %273 = vmatpush.msra.mxu0 0.0
        %274 = vmatpush.msra.mxu0 0.0
        %275 = vmatpush.msra.mxu0 0.0
        %276 = vmatpush.msra.mxu0 0.0
        %277 = vmatpush.msra.mxu0 0.0
        %278 = vmatpush.msra.mxu0 0.0
        %279 = vmatpush.msra.mxu0 0.0
        %280 = vmatpush.msra.mxu0 0.0
        %281 = vmatpush.msra.mxu0 0.0
        %282 = vmatpush.msra.mxu0 0.0
        %283 = vmatpush.msra.mxu0 0.0
        %284 = vmatpush.msra.mxu0 %v267
        %285 = vmatmul.f32.gmra.mxu0 %v263
        %v286 = vpop.f32.mrf.mxu0
        %v287 = vadd.f32 0.0, %v286
        %288 = vdwg.mxu0
        %v289 = vadd.f32 %v258, %v287
        %v290 = vld [vmem:[%s1] sm:$0xff]
        %vm291 = vcmask 64512
        %v293 = vsel %vm291, %v290, 0
        %295 = vmatpush.msra.mxu0 0.0
        %296 = vmatpush.msra.mxu0 0.0
        %297 = vmatpush.msra.mxu0 0.0
        %298 = vmatpush.msra.mxu0 0.0
        %299 = vmatpush.msra.mxu0 0.0
        %300 = vmatpush.msra.mxu0 0.0
        %301 = vmatpush.msra.mxu0 0.0
        %302 = vmatpush.msra.mxu0 0.0
        %303 = vmatpush.msra.mxu0 0.0
        %304 = vmatpush.msra.mxu0 0.0
        %305 = vmatpush.msra.mxu0 0.0
        %306 = vmatpush.msra.mxu0 0.0
        %307 = vmatpush.msra.mxu0 0.0
        %308 = vmatpush.msra.mxu0 0.0
        %309 = vmatpush.msra.mxu0 0.0
        %310 = vmatpush.msra.mxu0 %v251
        %311 = vmatmul.f32.gmra.mxu0 %v293
        %v312 = vpop.f32.mrf.mxu0
        %v313 = vadd.f32 0.0, %v312
        %314 = vdwg.mxu0
        %v315 = vadd.f32 %v289, %v313
        %v316 = vld [vmem:[%s2] sm:$0xff]
        %v318 = vsel %vm291, %v316, 0
        %320 = vmatpush.msra.mxu0 0.0
        %321 = vmatpush.msra.mxu0 0.0
        %322 = vmatpush.msra.mxu0 0.0
        %323 = vmatpush.msra.mxu0 0.0
        %324 = vmatpush.msra.mxu0 0.0
        %325 = vmatpush.msra.mxu0 0.0
        %326 = vmatpush.msra.mxu0 0.0
        %327 = vmatpush.msra.mxu0 0.0
        %328 = vmatpush.msra.mxu0 0.0
        %329 = vmatpush.msra.mxu0 0.0
        %330 = vmatpush.msra.mxu0 0.0
        %331 = vmatpush.msra.mxu0 0.0
        %332 = vmatpush.msra.mxu0 0.0
        %333 = vmatpush.msra.mxu0 0.0
        %334 = vmatpush.msra.mxu0 0.0
        %335 = vmatpush.msra.mxu0 %v253
        %336 = vmatmul.f32.gmra.mxu0 %v318
        %v337 = vpop.f32.mrf.mxu0
        %v338 = vadd.f32 0.0, %v337
        %339 = vdwg.mxu0
        %v340 = vadd.f32 %v315, %v338
        %341 = vst [vmem:[%s239] sm:$0xff] %v340
        %s342 = sand.u32 %s153, 1
        %s343 = scalar_lea.sflag [#allocation3], %s342
        %s344 = sand.u32 %s153, 1
        %s345 = smul.addr %s344, 8
        %s346 = scalar_lea.vmem [#allocation2], %s345
        // Predicated region
        $region41: #{tpu_custom_call.1} parent=39 // pred_check
          %p347 = pneg %p163
        $region42: #{tpu_custom_call.1} parent=39 // pred_check_branch
          %349 = sbr.rel (%p347) target = $region44
        $region43: #{tpu_custom_call.1} parent=39 // pred_region
          %351 = vsyncadd %s343, 0
          %s352 = sadd.s32 %s24, %s23
          %s353 = smul.addr %s352, 8
          %s354 = scalar_lea.hbm %s5, %s353
          %s356 = sshll.u32 %s346, 4
          %s357 = int_to_ptr.vmem [resolvable:$true] %s356
          %s358 = sshll.u32 %s354, 4
          %s359 = int_to_ptr.hbm [resolvable:$true] %s358
          %361 = dma.vmem_to_hbm [thread:$0]  %s357, 128, %s359, %s343
        $region44: #{tpu_custom_call.1} parent=39 // pred_fallthru
          _
      $region40: #{tpu_custom_call.1} parent=5 // pred_fallthru
        _
      %p362 = scmp.le.s32.totalorder 2, %s14
      // Predicated region
      $region45: #{tpu_custom_call.1} parent=5 // pred_check
        %p363 = pneg %p362
      $region46: #{tpu_custom_call.1} parent=5 // pred_check_branch
        %365 = sbr.rel (%p363) target = $region48
      $region47: #{tpu_custom_call.1} parent=5 // pred_region
        %s366 = ssub.s32 %s14, 2
        // Predicated region
        $region49: #{tpu_custom_call.1} parent=47 // pred_check
          %p367 = pneg %p169
        $region50: #{tpu_custom_call.1} parent=47 // pred_check_branch
          %369 = sbr.rel (%p367) target = $region52
        $region51: #{tpu_custom_call.1} parent=47 // pred_region
          %s370 = sand.u32 %s154, 1
          %s371 = scalar_lea.sflag [#allocation3], %s370
          %s372 = sand.u32 %s154, 1
          %s373 = smul.addr %s372, 8
          %s374 = scalar_lea.vmem [#allocation2], %s373
          %376 = dma.done %s371, 128
        $region52: #{tpu_custom_call.1} parent=47 // pred_fallthru
          _
      $region48: #{tpu_custom_call.1} parent=5 // pred_fallthru
        _
    $region6: #{tpu_custom_call.1} parent=1 // loop_footer
      %s18 = sadd.s32 1, %s14
    $region7: #{tpu_custom_call.1} parent=1 // loop_footer_branch
      %13 = sbr.rel target = $region3
    $region8: #{tpu_custom_call.1} parent=1 // loop_exit
      _
    %377 = vsyncpa [#allocation3], 1
    %s378 = scalar_lea.sflag [#allocation3], 1
    %379 = vsyncpa %s378, 1

</llo_original>
